<compile_context>
chip_gen: v6e
topology: v6e:2x2x1
jax: 0.10.0
libtpu: 0.0.40
codegen_flags: <defaults>
</compile_context>

<pallas_src>
import functools

import jax
import jax.numpy as jnp
from jax.experimental import pallas as pl
from jax.experimental.pallas import tpu as pltpu


def _round_up(x, m):
    return ((x + m - 1) // m) * m


def _num_parallel_splits():
    """2-way TensorCore split only on v7x (2 TCs/chip); 1 elsewhere."""
    try:
        kind = jax.devices()[0].device_kind.lower()
    except Exception:
        return 1
    if "v7" in kind or "tpu7" in kind:
        return 2
    return 1


def _focal_loss_kernel(logits_ref, targets_ref, out_ref, acc_ref, *,
                       gamma, n_rows, tile_rows, steps_per_split,
                       alpha_pair, masked):
    c = pl.program_id(0)          # parallel split (TensorCore on v7x)
    i = pl.program_id(1)          # row-tile step within the split

    @pl.when(i == 0)
    def _init():
        acc_ref[...] = jnp.zeros_like(acc_ref)

    x = logits_ref[...].astype(jnp.float32)            # (TM, C)
    t = targets_ref[...]                               # (TM, 1) int32

    # Row-wise logsumexp + select-reduce gather of the target logit.
    # 3 cross-lane reduce passes total (max, sum(exp), select-sum).
    m = jnp.max(x, axis=1, keepdims=True)              # (TM, 1)
    s = jnp.sum(jnp.exp(x - m), axis=1, keepdims=True) # (TM, 1)
    col = jax.lax.broadcasted_iota(jnp.int32, x.shape, 1)
    x_t = jnp.sum(jnp.where(col == t, x, 0.0), axis=1, keepdims=True)

    log_p = x_t - m - jnp.log(s)                       # log softmax[target]
    one_minus = 1.0 - jnp.exp(log_p)                   # 1 - p_target

    # Focal modulating factor: avoid jnp.power for integer gamma.
    if gamma == 2.0:
        focal = one_minus * one_minus
    elif float(gamma).is_integer() and gamma >= 0.0:
        focal = jnp.ones_like(one_minus)
        for _ in range(int(gamma)):
            focal = focal * one_minus
    else:
        focal = jnp.power(one_minus, gamma)

    loss = -(focal * log_p)                            # (TM, 1)
    if alpha_pair is not None:
        # Scalar-alpha path (binary classification): alpha values are
        # compile-time constants, so select on the target index — no gather.
        a0, a1 = alpha_pair
        loss = loss * jnp.where(t == 0, jnp.float32(a0), jnp.float32(a1))

    if masked:
        row = jax.lax.broadcasted_iota(jnp.int32, loss.shape, 0)
        row = row + (c * steps_per_split + i) * tile_rows
        loss = jnp.where(row < n_rows, loss, 0.0)

    # Plain vector add each step; reduce only at finalize.
    acc_ref[...] += loss

    @pl.when(i == pl.num_programs(1) - 1)
    def _finalize():
        partial = jnp.sum(acc_ref[...])
        out_ref[...] = jnp.broadcast_to(partial, out_ref.shape)


def focal_loss(logits, targets, alpha=None, gamma=2.0, size_average=True,
               max_block_rows=None):
    """Pallas implementation of FocalLoss.forward.

    logits:  (N, C) float (any float dtype; upcast to f32 in-kernel)
    targets: (N,)   int class indices
    alpha:   None (-> ones) or float scalar (-> [alpha, 1 - alpha], needs C==2)
    Returns a scalar float32.
    """
    N, C = logits.shape
    if alpha is None:
        alpha_pair = None
    else:
        assert C == 2, "scalar alpha path implies binary classification (C==2)"
        alpha_pair = (float(alpha), 1.0 - float(alpha))

    targets_2d = targets.reshape(N, 1).astype(jnp.int32)

    # ---- Byte-based row-tile sizing (dtype aware) ----
    in_bytes = jnp.dtype(logits.dtype).itemsize
    lane_c = _round_up(C, 128)                       # lane padding of the C axis
    logits_row = lane_c * in_bytes                   # bytes per row of one logits buffer
    # Per-row VMEM: double-buffered logits + double-buffered lane-padded int32
    # targets + single-buffered f32 accumulator row.
    per_row = 2 * logits_row + 2 * 128 * 4 + 128 * 4
    TARGET_LOGITS_BUF = 2 << 20                      # ~2 MiB per logits buffer
    WORKING_SET_BUDGET = 10 << 20                    # fits all generations' scoped VMEM
    tm = min(TARGET_LOGITS_BUF // logits_row, WORKING_SET_BUDGET // per_row)
    if max_block_rows is not None:
        tm = min(tm, int(max_block_rows))
    tm = min(tm, _round_up(N, 8))
    tm = max(8, (tm // 8) * 8)

    # ---- Generation-gated 2-TensorCore split (v7x only) ----
    num_splits = _num_parallel_splits()
    if (N + tm - 1) // tm < 2:
        num_splits = 1

    n_pad = _round_up(N, num_splits * tm)
    if n_pad != N:
        logits = jnp.pad(logits, ((0, n_pad - N), (0, 0)))
        targets_2d = jnp.pad(targets_2d, ((0, n_pad - N), (0, 0)))
    steps = n_pad // (num_splits * tm)

    working_set = tm * per_row + num_splits * 8 * 128 * 4
    vmem_limit = int(min(32 << 20, max(16 << 20, 2 * working_set)))

    kernel = functools.partial(
        _focal_loss_kernel,
        gamma=float(gamma),
        n_rows=N,
        tile_rows=tm,
        steps_per_split=steps,
        alpha_pair=alpha_pair,
        masked=(n_pad != N),
    )

    out = pl.pallas_call(
        kernel,
        grid=(num_splits, steps),
        out_shape=jax.ShapeDtypeStruct((num_splits * 8, 128), jnp.float32),
        in_specs=[
            pl.BlockSpec((tm, C), lambda c, i: (c * steps + i, 0)),  # logits tile
            pl.BlockSpec((tm, 1), lambda c, i: (c * steps + i, 0)),  # targets tile
        ],
        # Lane-dense (8, 128) partial-sum block per split, written once.
        out_specs=pl.BlockSpec((8, 128), lambda c, i: (c, 0)),
        scratch_shapes=[pltpu.VMEM((tm, 1), jnp.float32)],            # per-core acc
        compiler_params=pltpu.CompilerParams(
            dimension_semantics=("parallel", "arbitrary"),
            vmem_limit_bytes=vmem_limit,
        ),
        cost_estimate=pl.CostEstimate(
            flops=int(8 * N * C),
            transcendentals=int(N * C + 3 * N),
            bytes_accessed=int(N * C * in_bytes + N * 4
                               + num_splits * 8 * 128 * 4),
        ),
    )(logits, targets_2d)

    total = jnp.sum(out[::8, 0])          # combine per-split partial sums
    if size_average:
        total = total / jnp.float32(N)
    return total


def _focal_loss_ref(logits, targets, alpha=None, gamma=2.0, size_average=True):
    """Pure-JAX reference mirroring the PyTorch module."""
    x = logits.astype(jnp.float32)
    p = jax.nn.softmax(x, axis=1)
    ids = targets.reshape(-1, 1).astype(jnp.int32)
    probs = jnp.take_along_axis(p, ids, axis=1)
    if alpha is None:
        a = jnp.ones_like(probs)
    else:
        a_vec = jnp.array([alpha, 1.0 - alpha], dtype=jnp.float32)
        a = a_vec[targets.astype(jnp.int32)].reshape(-1, 1)
    batch_loss = -a * jnp.power(1.0 - probs, gamma) * jnp.log(probs)
    return jnp.mean(batch_loss) if size_average else jnp.sum(batch_loss)


if __name__ == "__main__":
    key = jax.random.PRNGKey(0)
    k1, k2, k3, k4, k5, k6 = jax.random.split(key, 6)

    # Case 1: single-tile path (batch=8, class_num=32), mean reduction.
    N1, C1 = 8, 32
    logits1 = jax.random.normal(k1, (N1, C1), dtype=jnp.float32)
    targets1 = jax.random.randint(k2, (N1,), 0, C1, dtype=jnp.int32)
    loss1 = jax.block_until_ready(
        focal_loss(logits1, targets1, alpha=None, gamma=2.0, size_average=True))
    ref1 = _focal_loss_ref(logits1, targets1)
    assert jnp.allclose(loss1, ref1, rtol=1e-5, atol=1e-5), (loss1, ref1)

    # Case 2: multi-step grid (+ v7x split if present) with a masked partial
    # last tile, sum reduction.
    N2, C2 = 20, 16
    logits2 = jax.random.normal(k3, (N2, C2), dtype=jnp.float32) * 3.0
    targets2 = jax.random.randint(k4, (N2,), 0, C2, dtype=jnp.int32)
    loss2 = jax.block_until_ready(
        focal_loss(logits2, targets2, alpha=None, gamma=2.0,
                   size_average=False, max_block_rows=8))
    ref2 = _focal_loss_ref(logits2, targets2, gamma=2.0, size_average=False)
    assert jnp.allclose(loss2, ref2, rtol=1e-5, atol=1e-5), (loss2, ref2)

    # Case 3: binary scalar-alpha path (C=2), bf16 logits on the wire.
    N3, C3 = 12, 2
    logits3 = jax.random.normal(k5, (N3, C3), dtype=jnp.float32).astype(jnp.bfloat16)
    targets3 = jax.random.randint(k6, (N3,), 0, C3, dtype=jnp.int32)
    loss3 = jax.block_until_ready(
        focal_loss(logits3, targets3, alpha=0.25, gamma=2.0, size_average=True))
    ref3 = _focal_loss_ref(logits3, targets3, alpha=0.25, gamma=2.0,
                           size_average=True)
    assert jnp.allclose(loss3, ref3, rtol=1e-3, atol=1e-3), (loss3, ref3)

    print("KERNEL_OK")
</pallas_src>

<mosaic_0001>
module attributes {stable_mosaic.version = 11 : i64} {
  func.func @_focal_loss_kernel(%arg0: i32, %arg1: i32, %arg2: memref<8x32xf32, #tpu.memory_space<vmem>>, %arg3: memref<8x1xi32, #tpu.memory_space<vmem>>, %arg4: memref<8x128xf32, #tpu.memory_space<vmem>>, %arg5: memref<8x1xf32, #tpu.memory_space<vmem>>) attributes {dimension_semantics = [#tpu.dimension_semantics<parallel>, #tpu.dimension_semantics<arbitrary>], iteration_bounds = array<i64: 1, 1>, scalar_prefetch = 0 : i64, scratch_operands = 1 : i64, tpu.core_type = #tpu.core_type<tc>, window_params = [{transform_indices = @transform_0, window_bounds = array<i64: 8, 32>}, {transform_indices = @transform_1, window_bounds = array<i64: 8, 1>}, {transform_indices = @transform_2, window_bounds = array<i64: 8, 128>}]} {
    %c0_i32 = arith.constant 0 : i32
    %0 = arith.cmpi eq, %arg1, %c0_i32 : i32
    %1 = arith.extui %0 : i1 to i32
    %c0_i32_0 = arith.constant 0 : i32
    %2 = arith.cmpi ne, %1, %c0_i32_0 : i32
    scf.if %2 {
      %cst_15 = arith.constant 0.000000e+00 : f32
      %35 = vector.broadcast %cst_15 : f32 to vector<8x1xf32>
      %c0_16 = arith.constant 0 : index
      %c0_17 = arith.constant 0 : index
      %36 = vector.load %arg5[%c0_16, %c0_17] : memref<8x1xf32, #tpu.memory_space<vmem>>, vector<8x1xf32>
      tpu.vector_store %arg5[%c0_16, %c0_17], %35 {strides = array<i32>} : memref<8x1xf32, #tpu.memory_space<vmem>>, vector<8x1xf32>,
    } else {
    }
    %c0 = arith.constant 0 : index
    %c0_1 = arith.constant 0 : index
    %3 = vector.load %arg2[%c0, %c0_1] : memref<8x32xf32, #tpu.memory_space<vmem>>, vector<8x32xf32>
    %c0_2 = arith.constant 0 : index
    %c0_3 = arith.constant 0 : index
    %4 = vector.load %arg3[%c0_2, %c0_3] : memref<8x1xi32, #tpu.memory_space<vmem>>, vector<8x1xi32>
    %cst = arith.constant dense<0xFF800000> : vector<8xf32>
    %5 = vector.multi_reduction <maximumf>, %3, %cst [1] : vector<8x32xf32> to vector<8xf32>
    %6 = vector.shape_cast %5 : vector<8xf32> to vector<8x1xf32>
    %7 = vector.broadcast %6 : vector<8x1xf32> to vector<8x32xf32>
    %8 = arith.subf %3, %7 : vector<8x32xf32>
    %9 = math.exp %8 : vector<8x32xf32>
    %cst_4 = arith.constant dense<0.000000e+00> : vector<8xf32>
    %10 = vector.multi_reduction <add>, %9, %cst_4 [1] : vector<8x32xf32> to vector<8xf32>
    %11 = vector.shape_cast %10 : vector<8xf32> to vector<8x1xf32>
    %12 = tpu.iota {dimensions = array<i32: 1>} : vector<8x32xi32>
    %13 = vector.broadcast %4 : vector<8x1xi32> to vector<8x32xi32>
    %14 = arith.cmpi eq, %12, %13 : vector<8x32xi32>
    %cst_5 = arith.constant 0.000000e+00 : f32
    %15 = vector.broadcast %cst_5 : f32 to vector<8x32xf32>
    %16 = arith.select %14, %3, %15 : vector<8x32xi1>, vector<8x32xf32>
    %cst_6 = arith.constant dense<0.000000e+00> : vector<8xf32>
    %17 = vector.multi_reduction <add>, %16, %cst_6 [1] : vector<8x32xf32> to vector<8xf32>
    %18 = vector.shape_cast %17 : vector<8xf32> to vector<8x1xf32>
    %19 = arith.subf %18, %6 : vector<8x1xf32>
    %20 = math.log %11 : vector<8x1xf32>
    %21 = arith.subf %19, %20 : vector<8x1xf32>
    %22 = math.exp %21 : vector<8x1xf32>
    %cst_7 = arith.constant 1.000000e+00 : f32
    %23 = vector.broadcast %cst_7 : f32 to vector<8x1xf32>
    %24 = arith.subf %23, %22 : vector<8x1xf32>
    %25 = arith.mulf %24, %24 : vector<8x1xf32>
    %26 = arith.mulf %25, %21 : vector<8x1xf32>
    %cst_8 = arith.constant 0.000000e+00 : f32
    %27 = vector.broadcast %cst_8 : f32 to vector<8x1xf32>
    %28 = arith.subf %27, %26 : vector<8x1xf32>
    %c0_9 = arith.constant 0 : index
    %c0_10 = arith.constant 0 : index
    %29 = vector.load %arg5[%c0_9, %c0_10] : memref<8x1xf32, #tpu.memory_space<vmem>>, vector<8x1xf32>
    %30 = arith.addf %29, %28 : vector<8x1xf32>
    %c0_11 = arith.constant 0 : index
    %c0_12 = arith.constant 0 : index
    %31 = vector.load %arg5[%c0_11, %c0_12] : memref<8x1xf32, #tpu.memory_space<vmem>>, vector<8x1xf32>
    tpu.vector_store %arg5[%c0_11, %c0_12], %30 {strides = array<i32>} : memref<8x1xf32, #tpu.memory_space<vmem>>, vector<8x1xf32>,
    %c0_i32_13 = arith.constant 0 : i32
    %32 = arith.cmpi eq, %arg1, %c0_i32_13 : i32
    %33 = arith.extui %32 : i1 to i32
    %c0_i32_14 = arith.constant 0 : i32
    %34 = arith.cmpi ne, %33, %c0_i32_14 : i32
    scf.if %34 {
      %c0_15 = arith.constant 0 : index
      %c0_16 = arith.constant 0 : index
      %35 = vector.load %arg5[%c0_15, %c0_16] : memref<8x1xf32, #tpu.memory_space<vmem>>, vector<8x1xf32>
      %36 = vector.shape_cast %35 : vector<8x1xf32> to vector<1x8x1xf32>
      %cst_17 = arith.constant dense<0.000000e+00> : vector<1xf32>
      %37 = vector.multi_reduction <add>, %36, %cst_17 [1, 2] : vector<1x8x1xf32> to vector<1xf32>
      %38 = vector.shape_cast %37 : vector<1xf32> to vector<1x1x1xf32>
      %39 = vector.extract %38[0, 0, 0] : f32 from vector<1x1x1xf32>
      %40 = vector.broadcast %39 : f32 to vector<8x128xf32>
      %c0_18 = arith.constant 0 : index
      %c0_19 = arith.constant 0 : index
      %41 = vector.load %arg4[%c0_18, %c0_19] : memref<8x128xf32, #tpu.memory_space<vmem>>, vector<8x128xf32>
      tpu.vector_store %arg4[%c0_18, %c0_19], %40 {strides = array<i32>} : memref<8x128xf32, #tpu.memory_space<vmem>>, vector<8x128xf32>,
    } else {
    }
    return
  }
  func.func @transform_0(%arg0: i32, %arg1: i32) -> (i32, i32) {
    %c1_i32 = arith.constant 1 : i32
    %0 = arith.muli %arg0, %c1_i32 : i32
    %1 = arith.addi %0, %arg1 : i32
    %c0_i32 = arith.constant 0 : i32
    %c0_i32_0 = arith.constant 0 : i32
    return %1, %c0_i32 : i32, i32
  }
  func.func @transform_1(%arg0: i32, %arg1: i32) -> (i32, i32) {
    %c1_i32 = arith.constant 1 : i32
    %0 = arith.muli %arg0, %c1_i32 : i32
    %1 = arith.addi %0, %arg1 : i32
    %c0_i32 = arith.constant 0 : i32
    %c0_i32_0 = arith.constant 0 : i32
    return %1, %c0_i32 : i32, i32
  }
  func.func @transform_2(%arg0: i32, %arg1: i32) -> (i32, i32) {
    %c0_i32 = arith.constant 0 : i32
    %c0_i32_0 = arith.constant 0 : i32
    return %arg0, %c0_i32 : i32, i32
  }
}

</mosaic_0001>

<llo_original>
// kernel: tpu_custom_call.1
$region0: #{tpu_custom_call.1}
  #allocation0 [shape = 'u32[]', space=smem, size = 0x4, offset = 0x4, fixed_abs, tag = 'smem constant byte address 0x4 - core index']
  #allocation1 [shape = 'u32[144,128]{1,0:T(1,128)}', space=vmem, size = 0x12000, scoped, tag = 'internal scratch']
  #allocation2 [shape = 'f32[8,1]{1,0:T(8,128)}', space=vmem, size = 0x1000, scoped, tag = 'scratch operand']
  %s0 = inlined_call_operand.vmem [shape: f32[8,32], index: 0, kind: input, shape index: {}]
  %s1 = inlined_call_operand.vmem [shape: s32[8,1], index: 1, kind: input, shape index: {}]
  %s2 = inlined_call_operand.hbm [shape: f32[8,128], index: 2, kind: output, shape index: {}]
  %s3 = sld [smem:[#allocation0]]
  $region26: #{tpu_custom_call.1} parent=0
    _
  %s5 = ssub.s32 1, %s3
  %s6 = scalar_select 0, %s5, %s3
  $region1: #{tpu_custom_call.1} parent=0
    #allocation3 [shape = 'u8[4096]{0}', space=vmem, size = 0x1000, scoped, tag = 'output window, operand 0, single buffered']
    #allocation4 [shape = 's32[1]{0}', space=sflag, size = 0x4, scoped, tag = 'scoped memory for tpu_custom_call.1']
    %7 = vsyncpa [#allocation4], 0
    // Predicated region
    $region2: #{tpu_custom_call.1} parent=1 // pred_check
      _
    $region3: #{tpu_custom_call.1} parent=1 // pred_check_branch
      %9 = sbr.rel (0) target = $region5
    $region4: #{tpu_custom_call.1} parent=1 // pred_region
      %s10 = sadd.s32 0, 0
      %p11 = scmp.lt.s32.totalorder %s10, 0
      %s12 = scalar_select %p11, %s10, 0
      %s13 = smul.addr %s12, 8
      %s14 = scalar_lea.vmem %s0, %s13
      %s15 = sadd.s32 0, 0
    $region5: #{tpu_custom_call.1} parent=1 // pred_fallthru
      _
    // Predicated region
    $region6: #{tpu_custom_call.1} parent=1 // pred_check
      _
    $region7: #{tpu_custom_call.1} parent=1 // pred_check_branch
      %17 = sbr.rel (0) target = $region9
    $region8: #{tpu_custom_call.1} parent=1 // pred_region
      %s18 = sadd.s32 0, 0
      %p19 = scmp.lt.s32.totalorder %s18, 0
      %s20 = scalar_select %p19, %s18, 0
      %s21 = smul.addr %s20, 8
      %s22 = scalar_lea.vmem %s1, %s21
      %s23 = sadd.s32 0, 0
    $region9: #{tpu_custom_call.1} parent=1 // pred_fallthru
      _
    %s24 = sadd.s32 0, 0
    %p25 = scmp.lt.s32.totalorder %s24, 0
    %s26 = scalar_select %p25, %s24, 0
    %s27 = smul.addr %s26, 8
    %s28 = scalar_lea.vmem %s0, %s27
    %s29 = sadd.s32 0, 0
    %p30 = scmp.lt.s32.totalorder %s29, 0
    %s31 = scalar_select %p30, %s29, 0
    %s32 = smul.addr %s31, 8
    %s33 = scalar_lea.vmem %s1, %s32
    %s34 = sadd.s32 0, 0
    %p35 = scmp.lt.s32.totalorder %s34, 0
    %s36 = scalar_select %p35, %s34, 0
    %s37 = smul.addr %s36, 8
    %s38 = scalar_lea.vmem %s0, %s37
    %s39 = sadd.s32 0, 0
    %s40 = sadd.s32 0, 0
    %p41 = scmp.lt.s32.totalorder %s40, 0
    %s42 = scalar_select %p41, %s40, 0
    %s43 = smul.addr %s42, 8
    %s44 = scalar_lea.vmem %s1, %s43
    %s45 = sadd.s32 0, 0
    %p46 = scmp.eq.s32.totalorder 0, 0
    // Predicated region
    $region10: #{tpu_custom_call.1} parent=1 // pred_check
      %p47 = pneg %p46
    $region11: #{tpu_custom_call.1} parent=1 // pred_check_branch
      %49 = sbr.rel (%p47) target = $region13
    $region12: #{tpu_custom_call.1} parent=1 // pred_region
      %vm50 = vcmask 7168
      %51 = vst.msk [vmem:[#allocation2] sm:$0xff] %vm50, 0.0
    $region13: #{tpu_custom_call.1} parent=1 // pred_fallthru
      _
    %v52 = vld [vmem:[%s38] sm:$0xff]
    %v53 = vld [vmem:[%s44] sm:$0xff]
    %vm54 = vcmask 261120
    %v55 = vsel %vm54, %v52, -inf
    %56 = vmax.xlane.f32.xlu0 %v55
    %v57 = vpop.xlane.xlu0 %56
    %v58 = vsub.f32 %v52, %v57
    %v59 = vmul.f32 %v58, 1.442695
    %v60 = vpow.pop %v59
    %v61 = vsel %vm54, %v60, 0.0
    %62 = vadd.xlane.f32.xlu0 %v61
    %v63 = vpop.xlane.xlu0 %62
    %v64 = vlaneseq
    %v65 = vand.u32 %v64, 127
    %66 = vset.pattern.permute.xlu0 0
    %67 = vperm.xlu0 %66, %v53
    %v68 = vpop.permute.xlu0 %67
    %vm69 = vcmp.eq.s32.totalorder %v65, %v68
    %v70 = vsel %vm69, %v52, 0.0
    %v71 = vsel %vm54, %v70, 0.0
    %72 = vadd.xlane.f32.xlu0 %v71
    %v73 = vpop.xlane.xlu0 %72
    %v74 = vsub.f32 %v73, %v57
    %v75 = vlog2.pop %v63
    %v76 = vmul.f32 %v75, 0.6931472
    %v77 = vsub.f32 %v74, %v76
    %v78 = vmul.f32 %v77, 1.442695
    %v79 = vpow.pop %v78
    %v80 = vsub.f32 1.0, %v79
    %v81 = vmul.f32 %v80, %v80
    %v82 = vmul.f32 %v81, %v77
    %v83 = vsub.f32 0.0, %v82
    %v84 = vld [vmem:[#allocation2] sm:$0xff]
    %v85 = vadd.f32 %v84, %v83
    %vm86 = vcmask 7168
    %87 = vst.msk [vmem:[#allocation2] sm:$0xff] %vm86, %v85
    // Predicated region
    $region14: #{tpu_custom_call.1} parent=1 // pred_check
      %p88 = pneg %p46
    $region15: #{tpu_custom_call.1} parent=1 // pred_check_branch
      %90 = sbr.rel (%p88) target = $region17
    $region16: #{tpu_custom_call.1} parent=1 // pred_region
      %v91 = vld [vmem:[#allocation2] sm:$0xff]
      %v92 = vsel %vm86, %v91, 0.0
      %93 = vadd.xlane.f32.xlu0 %v92
      %v94 = vpop.xlane.xlu0 %93
      %v95 = vrot.slane %v94, 4
      %v96 = vadd.f32 %v94, %v95
      %v97 = vrot.slane %v96, 2
      %v98 = vadd.f32 %v96, %v97
      %v99 = vrot.slane %v98, 1
      %v100 = vadd.f32 %v98, %v99
      %s101 = vtos %v100
      %v102 = vstv %s101
      %103 = vst [vmem:[#allocation3] sm:$0xff] %v102
    $region17: #{tpu_custom_call.1} parent=1 // pred_fallthru
      _
    // Predicated region
    $region18: #{tpu_custom_call.1} parent=1 // pred_check
      _
    $region19: #{tpu_custom_call.1} parent=1 // pred_check_branch
      %105 = sbr.rel (0) target = $region21
    $region20: #{tpu_custom_call.1} parent=1 // pred_region
      %s107 = ssub.s32 128, 128
      %108 = vsyncadd [#allocation4], %s107
      %s110 = sshll.u32 [#allocation3], 4
      %s111 = int_to_ptr.vmem [resolvable:$true] %s110
      %113 = dma.vmem_to_hbm [thread:$0]  %s111, 128, %s2, [#allocation4]
    $region21: #{tpu_custom_call.1} parent=1 // pred_fallthru
      _
    // Predicated region
    $region22: #{tpu_custom_call.1} parent=1 // pred_check
      _
    $region23: #{tpu_custom_call.1} parent=1 // pred_check_branch
      %115 = sbr.rel (0) target = $region25
    $region24: #{tpu_custom_call.1} parent=1 // pred_region
      %116 = dma.done [#allocation4], 128
    $region25: #{tpu_custom_call.1} parent=1 // pred_fallthru
      _
    %117 = vsyncpa [#allocation4], 1

</llo_original>
